<compile_context>
chip_gen: v7x
topology: tpu7x:2x2x1
jax: 0.10.0
libtpu: 0.0.40
codegen_flags: <defaults>
</compile_context>

<pallas_src>
import numpy as np
import jax
import jax.numpy as jnp
from jax.experimental import pallas as pl
from jax.experimental.pallas import tpu as pltpu

N_QUBITS = 4
N_LAYERS = 2
QUANTUM_FEATURES = 8
DIM = 2 ** N_QUBITS          # 16 basis amplitudes
LANES = 128                  # TPU lane width
TB_MAX = 16384               # max batch tile (lanes); ~7 MB live VMEM worst case
VMEM_LIMIT_BYTES = 32 * 1024 * 1024   # explicit: > v5e's 16 MiB default, < v7x phys


# ---------------- parameter setup (glue, plain numpy, cached) ----------------
def _ry(t):
    c, s = np.cos(t / 2.0), np.sin(t / 2.0)
    return np.array([[c, -s], [s, c]], dtype=np.complex128)


def _rz(t):
    return np.array([[np.exp(-1j * t / 2.0), 0.0],
                     [0.0, np.exp(1j * t / 2.0)]], dtype=np.complex128)


def _one_qubit(gate, wire):
    # wire 0 = most significant bit (PennyLane convention)
    U = np.array([[1.0]], dtype=np.complex128)
    for w in range(N_QUBITS):
        U = np.kron(U, gate if w == wire else np.eye(2, dtype=np.complex128))
    return U


def _cnot(control, target):
    U = np.zeros((DIM, DIM), dtype=np.complex128)
    for idx in range(DIM):
        bits = [(idx >> (N_QUBITS - 1 - w)) & 1 for w in range(N_QUBITS)]
        if bits[control] == 1:
            bits[target] ^= 1
        j = 0
        for b in bits:
            j = (j << 1) | b
        U[j, idx] = 1.0
    return U


def build_layer_unitary(weights):
    """16x16 unitary of the weight-parameterised circuit layers."""
    U = np.eye(DIM, dtype=np.complex128)
    for layer in range(N_LAYERS):
        for i in range(N_QUBITS):
            U = _one_qubit(_ry(weights[layer, i, 0]), i) @ U
            U = _one_qubit(_rz(weights[layer, i, 1]), i) @ U
        for i in range(N_QUBITS - 1):
            U = _cnot(i, i + 1) @ U
        if N_QUBITS > 2:
            U = _cnot(N_QUBITS - 1, 0) @ U
    return U


_UNITARY_CACHE = {}


def _get_fused_unitary(weights_np):
    """[Re(U); Im(U)] as a resident (32,16) f32 device array, cached by weights."""
    w = np.asarray(weights_np, dtype=np.float64)
    key = (w.shape, w.tobytes())
    if key not in _UNITARY_CACHE:
        if len(_UNITARY_CACHE) > 64:        # bound host-side cache growth
            _UNITARY_CACHE.clear()
        U = build_layer_unitary(w)
        fused = np.concatenate([U.real, U.imag], axis=0).astype(np.float32)  # (32, 16)
        _UNITARY_CACHE[key] = jnp.asarray(fused)
    return _UNITARY_CACHE[key]


def _build_sign_matrix_np():
    """S2 = [S | S], S[q, j] = (-1)^{bit_q(j)}; shape (N_QUBITS, 2*DIM)."""
    j = np.arange(DIM)
    S = np.stack(
        [1.0 - 2.0 * ((j >> (N_QUBITS - 1 - q)) & 1) for q in range(N_QUBITS)],
        axis=0)
    return np.concatenate([S, S], axis=1).astype(np.float32)       # (4, 32)


_SIGNS_NP = _build_sign_matrix_np()
_SIGNS_DEV = None


def _get_sign_matrix():
    global _SIGNS_DEV
    if _SIGNS_DEV is None:
        _SIGNS_DEV = jnp.asarray(_SIGNS_NP)
    return _SIGNS_DEV


# ---------------- Pallas kernel (hot path, batch on lanes) ----------------
def quantum_embedding_kernel(xT_ref, ufused_ref, signs_ref, out_ref):
    # xT_ref:     (N_QUBITS, TB)     raw features, batch along lanes
    # ufused_ref: (2*DIM, DIM)       [Re(U); Im(U)] of the fixed layer unitary
    # signs_ref:  (N_QUBITS, 2*DIM)  [S | S] Z-sign matrix
    # out_ref:    (N_QUBITS, TB)     <Z_q> per qubit, batch along lanes
    half = (0.5 * jnp.float32(np.pi)) * jnp.tanh(xT_ref[...])      # (4, TB) EUP
    s = jnp.sin(half)
    # half in (-pi/2, pi/2) so cos >= 0: sqrt goes to the idle EUP slot instead
    # of a second VPU polynomial.
    c = jnp.sqrt(1.0 - s * s)

    # Basis-state bit column, generated in-kernel (no table DMA).
    j_col = jax.lax.broadcasted_iota(jnp.int32, (DIM, 1), 0)       # (16, 1)

    # Product state after the RY angle-embedding applied to |0000>:
    #   psi[j, b] = prod_q ( cos(a_q/2) if bit_q(j)==0 else sin(a_q/2) )
    psi = None
    for q in range(N_QUBITS):
        bit = ((j_col >> (N_QUBITS - 1 - q)) & 1) == 1             # (16, 1) bool
        fq = jnp.where(bit, s[q:q + 1, :], c[q:q + 1, :])          # (16, TB)
        psi = fq if psi is None else psi * fq

    # Apply the fixed layer unitary: one fused MXU matmul, lane-dense N = TB.
    f = jnp.dot(ufused_ref[...], psi, preferred_element_type=jnp.float32)  # (32, TB)
    f2 = f * f                                                     # |Re|^2 / |Im|^2 halves

    # <Z_q> = sum_j (+-1)^{bit_q(j)} * (Re_j^2 + Im_j^2): one tiny sign matmul
    # on the idle MXU slot + a single unmasked lane-dense (4, TB) store.
    out_ref[...] = jnp.dot(signs_ref[...], f2, preferred_element_type=jnp.float32)


# ---------------- wrapper ----------------
def quantum_embedding_forward(x, weights_np, tb=None):
    x = jnp.asarray(x, dtype=jnp.float32)
    if x.ndim == 1:
        x = x[None, :]
    n_features = min(x.shape[-1], QUANTUM_FEATURES)
    xq = x[:, :n_features]
    # Truncate / zero-pad to N_QUBITS angles (zero-padding before tanh is
    # equivalent to the module's zero-padding after tanh, since tanh(0)=0).
    if xq.shape[1] < N_QUBITS:
        xq = jnp.pad(xq, ((0, 0), (0, N_QUBITS - xq.shape[1])))
    else:
        xq = xq[:, :N_QUBITS]
    B = xq.shape[0]

    ufused = _get_fused_unitary(weights_np)                        # (32, 16) cached
    signs = _get_sign_matrix()                                     # (4, 32)  cached

    # Batch-on-lanes layout, tiled over a 1-D grid of lane-dense batch tiles.
    if tb is None:
        b_pad = ((B + LANES - 1) // LANES) * LANES
        if b_pad <= LANES:
            tb = LANES
        else:
            # At least two tiles so both v7x TensorCores get work; capped at
            # TB_MAX to amortise per-step overhead while staying VMEM-safe.
            tb = min(TB_MAX, ((b_pad // 2 + LANES - 1) // LANES) * LANES)
    assert tb % LANES == 0
    n_tiles = pl.cdiv(B, tb)
    B_pad = n_tiles * tb

    # Keep wrapper-side HBM passes minimal: pad / slice only when needed.
    # TODO(synk): a (N_QUBITS, B) consumer could skip both transposes entirely.
    xT = xq.T                                                      # (4, B)
    if B_pad != B:
        xT = jnp.pad(xT, ((0, 0), (0, B_pad - B)))                 # (4, B_pad)

    outT = pl.pallas_call(
        quantum_embedding_kernel,
        out_shape=jax.ShapeDtypeStruct((N_QUBITS, B_pad), jnp.float32),
        grid_spec=pl.GridSpec(
            grid=(n_tiles,),
            in_specs=[
                pl.BlockSpec((N_QUBITS, tb), lambda i: (0, i)),
                pl.BlockSpec((2 * DIM, DIM), lambda i: (0, 0)),
                pl.BlockSpec((N_QUBITS, 2 * DIM), lambda i: (0, 0)),
            ],
            out_specs=pl.BlockSpec((N_QUBITS, tb), lambda i: (0, i)),
        ),
        compiler_params=pltpu.CompilerParams(
            dimension_semantics=("parallel",),
            vmem_limit_bytes=VMEM_LIMIT_BYTES),
    )(xT, ufused, signs)

    if B_pad != B:
        outT = outT[:, :B]
    return outT.T                                                  # (B, N_QUBITS)


# ---------------- pure-numpy reference (gate-by-gate statevector) ----------------
def reference_forward(x_np, weights_np):
    x_np = np.asarray(x_np, dtype=np.float64)
    if x_np.ndim == 1:
        x_np = x_np[None, :]
    nf = min(x_np.shape[-1], QUANTUM_FEATURES)
    xq = np.tanh(x_np[:, :nf]) * np.pi
    U_layers = build_layer_unitary(np.asarray(weights_np, dtype=np.float64))
    outs = []
    for b in range(xq.shape[0]):
        ang = np.zeros(N_QUBITS)
        n_use = min(N_QUBITS, xq.shape[1])
        ang[:n_use] = xq[b, :n_use]
        psi = np.zeros(DIM, dtype=np.complex128)
        psi[0] = 1.0
        for q in range(N_QUBITS):
            psi = _one_qubit(_ry(ang[q]), q) @ psi
        psi = U_layers @ psi
        probs = np.abs(psi) ** 2
        ev = []
        for q in range(N_QUBITS):
            signs = 1.0 - 2.0 * ((np.arange(DIM) >> (N_QUBITS - 1 - q)) & 1)
            ev.append(float(np.sum(probs * signs)))
        outs.append(ev)
    return np.array(outs, dtype=np.float64)


if __name__ == "__main__":
    key = jax.random.PRNGKey(0)
    kx, kw, kx2 = jax.random.split(key, 3)
    # Demo shapes matching the module: x (batch=2, n_features=8); weights (2,4,2)*0.1
    x = jax.random.normal(kx, (2, 8), dtype=jnp.float32)
    weights = 0.1 * jax.random.normal(kw, (N_LAYERS, N_QUBITS, 2), dtype=jnp.float32)
    weights_np = np.asarray(weights)

    out = quantum_embedding_forward(x, weights_np)
    out = jax.block_until_ready(out)
    ref = reference_forward(np.asarray(x), weights_np)
    np.testing.assert_allclose(np.asarray(out), ref, atol=1e-4, rtol=1e-4)

    # Exercise the multi-tile (grid > 1) pipelined path with a small tile size.
    x_big = jax.random.normal(kx2, (260, 8), dtype=jnp.float32)
    ref_big = reference_forward(np.asarray(x_big), weights_np)

    out_big = quantum_embedding_forward(x_big, weights_np, tb=128)   # 3 tiles
    out_big = jax.block_until_ready(out_big)
    np.testing.assert_allclose(np.asarray(out_big), ref_big, atol=1e-4, rtol=1e-4)

    out_auto = quantum_embedding_forward(x_big, weights_np)          # default: 2 tiles
    out_auto = jax.block_until_ready(out_auto)
    np.testing.assert_allclose(np.asarray(out_auto), ref_big, atol=1e-4, rtol=1e-4)

    print("KERNEL_OK")
</pallas_src>

<mosaic_0001>
module attributes {stable_mosaic.version = 11 : i64} {
  func.func @quantum_embedding_kernel(%arg0: i32, %arg1: memref<4x128xf32, #tpu.memory_space<vmem>>, %arg2: memref<32x16xf32, #tpu.memory_space<vmem>>, %arg3: memref<4x32xf32, #tpu.memory_space<vmem>>, %arg4: memref<4x128xf32, #tpu.memory_space<vmem>>) attributes {dimension_semantics = [#tpu.dimension_semantics<parallel>], iteration_bounds = array<i64: 1>, scalar_prefetch = 0 : i64, scratch_operands = 0 : i64, tpu.core_type = #tpu.core_type<tc>, window_params = [{transform_indices = @transform_0, window_bounds = array<i64: 4, 128>}, {pipeline_mode = #tpu.pipeline_mode<synchronous>, transform_indices = @transform_1, window_bounds = array<i64: 32, 16>}, {pipeline_mode = #tpu.pipeline_mode<synchronous>, transform_indices = @transform_2, window_bounds = array<i64: 4, 32>}, {transform_indices = @transform_3, window_bounds = array<i64: 4, 128>}]} {
    %cst = arith.constant 5.000000e-01 : f32
    %cst_0 = arith.constant 3.14159274 : f32
    %0 = arith.mulf %cst, %cst_0 : f32
    %c0 = arith.constant 0 : index
    %c0_1 = arith.constant 0 : index
    %1 = vector.load %arg1[%c0, %c0_1] : memref<4x128xf32, #tpu.memory_space<vmem>>, vector<4x128xf32>
    %2 = math.tanh %1 : vector<4x128xf32>
    %3 = vector.broadcast %0 : f32 to vector<4x128xf32>
    %4 = arith.mulf %3, %2 : vector<4x128xf32>
    %5 = math.sin %4 : vector<4x128xf32>
    %6 = arith.mulf %5, %5 : vector<4x128xf32>
    %cst_2 = arith.constant 1.000000e+00 : f32
    %7 = vector.broadcast %cst_2 : f32 to vector<4x128xf32>
    %8 = arith.subf %7, %6 : vector<4x128xf32>
    %9 = math.sqrt %8 : vector<4x128xf32>
    %10 = tpu.iota {dimensions = array<i32: 0>} : vector<16x1xi32>
    %c3_i32 = arith.constant 3 : i32
    %11 = vector.broadcast %c3_i32 : i32 to vector<16x1xi32>
    %12 = arith.shrsi %10, %11 : vector<16x1xi32>
    %c1_i32 = arith.constant 1 : i32
    %13 = vector.broadcast %c1_i32 : i32 to vector<16x1xi32>
    %14 = arith.andi %12, %13 : vector<16x1xi32>
    %c1_i32_3 = arith.constant 1 : i32
    %15 = vector.broadcast %c1_i32_3 : i32 to vector<16x1xi32>
    %16 = arith.cmpi eq, %14, %15 : vector<16x1xi32>
    %17 = vector.extract_strided_slice %5 {offsets = [0, 0], sizes = [1, 128], strides = [1, 1]} : vector<4x128xf32> to vector<1x128xf32>
    %18 = vector.extract_strided_slice %9 {offsets = [0, 0], sizes = [1, 128], strides = [1, 1]} : vector<4x128xf32> to vector<1x128xf32>
    %19 = vector.shape_cast %16 : vector<16x1xi1> to vector<16x1xi1>
    %20 = vector.broadcast %19 : vector<16x1xi1> to vector<16x128xi1>
    %21 = vector.shape_cast %17 : vector<1x128xf32> to vector<1x128xf32>
    %22 = vector.broadcast %21 : vector<1x128xf32> to vector<16x128xf32>
    %23 = vector.shape_cast %18 : vector<1x128xf32> to vector<1x128xf32>
    %24 = vector.broadcast %23 : vector<1x128xf32> to vector<16x128xf32>
    %25 = arith.select %20, %22, %24 : vector<16x128xi1>, vector<16x128xf32>
    %c2_i32 = arith.constant 2 : i32
    %26 = vector.broadcast %c2_i32 : i32 to vector<16x1xi32>
    %27 = arith.shrsi %10, %26 : vector<16x1xi32>
    %c1_i32_4 = arith.constant 1 : i32
    %28 = vector.broadcast %c1_i32_4 : i32 to vector<16x1xi32>
    %29 = arith.andi %27, %28 : vector<16x1xi32>
    %c1_i32_5 = arith.constant 1 : i32
    %30 = vector.broadcast %c1_i32_5 : i32 to vector<16x1xi32>
    %31 = arith.cmpi eq, %29, %30 : vector<16x1xi32>
    %32 = vector.extract_strided_slice %5 {offsets = [1, 0], sizes = [1, 128], strides = [1, 1]} : vector<4x128xf32> to vector<1x128xf32>
    %33 = vector.extract_strided_slice %9 {offsets = [1, 0], sizes = [1, 128], strides = [1, 1]} : vector<4x128xf32> to vector<1x128xf32>
    %34 = vector.shape_cast %31 : vector<16x1xi1> to vector<16x1xi1>
    %35 = vector.broadcast %34 : vector<16x1xi1> to vector<16x128xi1>
    %36 = vector.shape_cast %32 : vector<1x128xf32> to vector<1x128xf32>
    %37 = vector.broadcast %36 : vector<1x128xf32> to vector<16x128xf32>
    %38 = vector.shape_cast %33 : vector<1x128xf32> to vector<1x128xf32>
    %39 = vector.broadcast %38 : vector<1x128xf32> to vector<16x128xf32>
    %40 = arith.select %35, %37, %39 : vector<16x128xi1>, vector<16x128xf32>
    %41 = arith.mulf %25, %40 : vector<16x128xf32>
    %c1_i32_6 = arith.constant 1 : i32
    %42 = vector.broadcast %c1_i32_6 : i32 to vector<16x1xi32>
    %43 = arith.shrsi %10, %42 : vector<16x1xi32>
    %c1_i32_7 = arith.constant 1 : i32
    %44 = vector.broadcast %c1_i32_7 : i32 to vector<16x1xi32>
    %45 = arith.andi %43, %44 : vector<16x1xi32>
    %c1_i32_8 = arith.constant 1 : i32
    %46 = vector.broadcast %c1_i32_8 : i32 to vector<16x1xi32>
    %47 = arith.cmpi eq, %45, %46 : vector<16x1xi32>
    %48 = vector.extract_strided_slice %5 {offsets = [2, 0], sizes = [1, 128], strides = [1, 1]} : vector<4x128xf32> to vector<1x128xf32>
    %49 = vector.extract_strided_slice %9 {offsets = [2, 0], sizes = [1, 128], strides = [1, 1]} : vector<4x128xf32> to vector<1x128xf32>
    %50 = vector.shape_cast %47 : vector<16x1xi1> to vector<16x1xi1>
    %51 = vector.broadcast %50 : vector<16x1xi1> to vector<16x128xi1>
    %52 = vector.shape_cast %48 : vector<1x128xf32> to vector<1x128xf32>
    %53 = vector.broadcast %52 : vector<1x128xf32> to vector<16x128xf32>
    %54 = vector.shape_cast %49 : vector<1x128xf32> to vector<1x128xf32>
    %55 = vector.broadcast %54 : vector<1x128xf32> to vector<16x128xf32>
    %56 = arith.select %51, %53, %55 : vector<16x128xi1>, vector<16x128xf32>
    %57 = arith.mulf %41, %56 : vector<16x128xf32>
    %c0_i32 = arith.constant 0 : i32
    %58 = vector.broadcast %c0_i32 : i32 to vector<16x1xi32>
    %59 = arith.shrsi %10, %58 : vector<16x1xi32>
    %c1_i32_9 = arith.constant 1 : i32
    %60 = vector.broadcast %c1_i32_9 : i32 to vector<16x1xi32>
    %61 = arith.andi %59, %60 : vector<16x1xi32>
    %c1_i32_10 = arith.constant 1 : i32
    %62 = vector.broadcast %c1_i32_10 : i32 to vector<16x1xi32>
    %63 = arith.cmpi eq, %61, %62 : vector<16x1xi32>
    %64 = vector.extract_strided_slice %5 {offsets = [3, 0], sizes = [1, 128], strides = [1, 1]} : vector<4x128xf32> to vector<1x128xf32>
    %65 = vector.extract_strided_slice %9 {offsets = [3, 0], sizes = [1, 128], strides = [1, 1]} : vector<4x128xf32> to vector<1x128xf32>
    %66 = vector.shape_cast %63 : vector<16x1xi1> to vector<16x1xi1>
    %67 = vector.broadcast %66 : vector<16x1xi1> to vector<16x128xi1>
    %68 = vector.shape_cast %64 : vector<1x128xf32> to vector<1x128xf32>
    %69 = vector.broadcast %68 : vector<1x128xf32> to vector<16x128xf32>
    %70 = vector.shape_cast %65 : vector<1x128xf32> to vector<1x128xf32>
    %71 = vector.broadcast %70 : vector<1x128xf32> to vector<16x128xf32>
    %72 = arith.select %67, %69, %71 : vector<16x128xi1>, vector<16x128xf32>
    %73 = arith.mulf %57, %72 : vector<16x128xf32>
    %c0_11 = arith.constant 0 : index
    %c0_12 = arith.constant 0 : index
    %74 = vector.load %arg2[%c0_11, %c0_12] : memref<32x16xf32, #tpu.memory_space<vmem>>, vector<32x16xf32>
    %cst_13 = arith.constant dense<0.000000e+00> : vector<32x128xf32>
    %75 = tpu.matmul %74, %73, %cst_13 {dimension_numbers = #tpu.dot_dimension_numbers<[1], [0], [0], [1], [0, 0, 1, 1], [], []>} : vector<32x16xf32>, vector<16x128xf32>, vector<32x128xf32> -> vector<32x128xf32>
    %76 = arith.mulf %75, %75 : vector<32x128xf32>
    %c0_14 = arith.constant 0 : index
    %c0_15 = arith.constant 0 : index
    %77 = vector.load %arg3[%c0_14, %c0_15] : memref<4x32xf32, #tpu.memory_space<vmem>>, vector<4x32xf32>
    %cst_16 = arith.constant dense<0.000000e+00> : vector<4x128xf32>
    %78 = tpu.matmul %77, %76, %cst_16 {dimension_numbers = #tpu.dot_dimension_numbers<[1], [0], [0], [1], [0, 0, 1, 1], [], []>} : vector<4x32xf32>, vector<32x128xf32>, vector<4x128xf32> -> vector<4x128xf32>
    %c0_17 = arith.constant 0 : index
    %c0_18 = arith.constant 0 : index
    %79 = vector.load %arg4[%c0_17, %c0_18] : memref<4x128xf32, #tpu.memory_space<vmem>>, vector<4x128xf32>
    tpu.vector_store %arg4[%c0_17, %c0_18], %78 {strides = array<i32>} : memref<4x128xf32, #tpu.memory_space<vmem>>, vector<4x128xf32>,
    return
  }
  func.func @transform_0(%arg0: i32) -> (i32, i32) {
    %c0_i32 = arith.constant 0 : i32
    %c0_i32_0 = arith.constant 0 : i32
    return %c0_i32, %arg0 : i32, i32
  }
  func.func @transform_1(%arg0: i32) -> (i32, i32) {
    %c0_i32 = arith.constant 0 : i32
    %c0_i32_0 = arith.constant 0 : i32
    %c0_i32_1 = arith.constant 0 : i32
    return %c0_i32, %c0_i32_0 : i32, i32
  }
  func.func @transform_2(%arg0: i32) -> (i32, i32) {
    %c0_i32 = arith.constant 0 : i32
    %c0_i32_0 = arith.constant 0 : i32
    %c0_i32_1 = arith.constant 0 : i32
    return %c0_i32, %c0_i32_0 : i32, i32
  }
  func.func @transform_3(%arg0: i32) -> (i32, i32) {
    %c0_i32 = arith.constant 0 : i32
    %c0_i32_0 = arith.constant 0 : i32
    return %c0_i32, %arg0 : i32, i32
  }
}

</mosaic_0001>

<llo_original>
// kernel: tpu_custom_call.1
$region0: #{tpu_custom_call.1}
  #allocation0 [shape = 'u32[]', space=smem, size = 0x4, offset = 0x4, fixed_abs, tag = 'smem constant byte address 0x4 - core index']
  #allocation1 [shape = 'u32[144,128]{1,0:T(1,128)}', space=vmem, size = 0x12000, scoped, tag = 'internal scratch']
  %s0 = inlined_call_operand.vmem [shape: f32[4,128], index: 0, kind: input, shape index: {}]
  %s1 = inlined_call_operand.vmem [shape: f32[32,16], index: 1, kind: input, shape index: {}]
  %s2 = inlined_call_operand.vmem [shape: f32[4,32], index: 2, kind: input, shape index: {}]
  %s3 = inlined_call_operand.hbm [shape: f32[4,128], index: 3, kind: output, shape index: {}]
  %s4 = sld [smem:[#allocation0]]
  $region22: #{tpu_custom_call.1} parent=0
    _
  %s6 = ssub.s32 1, %s4
  %s7 = scalar_select 0, %s6, %s4
  $region1: #{tpu_custom_call.1} parent=0
    #allocation2 [shape = 'u8[2048]{0}', space=vmem, size = 0x800, scoped, tag = 'output window, operand 0, single buffered']
    #allocation3 [shape = 's32[1]{0}', space=sflag, size = 0x4, scoped, tag = 'scoped memory for tpu_custom_call.1']
    %8 = vsyncpa [#allocation3], 0
    // Predicated region
    $region2: #{tpu_custom_call.1} parent=1 // pred_check
      _
    $region3: #{tpu_custom_call.1} parent=1 // pred_check_branch
      %10 = sbr.rel (0) target = $region5
    $region4: #{tpu_custom_call.1} parent=1 // pred_region
      _
    $region5: #{tpu_custom_call.1} parent=1 // pred_fallthru
      _
    // Predicated region
    $region6: #{tpu_custom_call.1} parent=1 // pred_check
      _
    $region7: #{tpu_custom_call.1} parent=1 // pred_check_branch
      %12 = sbr.rel (0) target = $region9
    $region8: #{tpu_custom_call.1} parent=1 // pred_region
      _
    $region9: #{tpu_custom_call.1} parent=1 // pred_fallthru
      _
    // Predicated region
    $region10: #{tpu_custom_call.1} parent=1 // pred_check
      _
    $region11: #{tpu_custom_call.1} parent=1 // pred_check_branch
      %14 = sbr.rel (0) target = $region13
    $region12: #{tpu_custom_call.1} parent=1 // pred_region
      _
    $region13: #{tpu_custom_call.1} parent=1 // pred_fallthru
      _
    %v15 = vld [vmem:[%s0] sm:$0xf]
    %v16 = vtanh.pop %v15
    %v17 = vmul.f32 %v16, 1.5707964
    %v18 = vand.u32 2147483647, %v17
    %vm19 = vcmp.le.f32.partialorder %v18, 0.7853982
    %vm20 = vcmp.lt.s32.totalorder %v17, 0
    %v21 = vand.u32 %v17, 2139095040
    %v22 = vshrl.u32 %v21, 23
    %v23 = vsub.s32 %v22, 127
    %v24 = vand.u32 2147483647, %v17
    %v25 = vand.u32 %v24, 8388607
    %v26 = vor.u32 %v25, 8388608
    %v27 = vsub.s32 0, %v26
    %v28 = vadd.s32 %v23, 1
    %vm29 = vcmp.gt.s32.totalorder %v28, 0
    %v30 = vsel %vm29, %v28, 0
    %v31 = vshrl.u32 %v30, 5
    %v32 = vand.u32 %v30, 31
    %v33 = vsub.s32 32, %v32
    %v34 = vshrl.u32 683565275, %v33
    %v35 = vshll.u32 683565275, %v32
    %v36 = vshrl.u32 2475754826, %v33
    %v37 = vor.u32 %v35, %v36
    %v38 = vshll.u32 2475754826, %v32
    %v39 = vshrl.u32 2131351028, %v33
    %v40 = vor.u32 %v38, %v39
    %v41 = vshll.u32 2131351028, %v32
    %v42 = vshrl.u32 2102212464, %v33
    %v43 = vor.u32 %v41, %v42
    %v44 = vshll.u32 2102212464, %v32
    %v45 = vshrl.u32 920167782, %v33
    %v46 = vor.u32 %v44, %v45
    %v47 = vshll.u32 920167782, %v32
    %v48 = vshrl.u32 1326507024, %v33
    %v49 = vor.u32 %v47, %v48
    %vm50 = vcmp.lt.s32.totalorder %v31, 1
    %vm51 = vcmp.lt.s32.totalorder %v31, 2
    %vm52 = vcmp.lt.s32.totalorder %v31, 3
    %vm53 = vcmp.lt.s32.totalorder %v31, 4
    %v54 = vsel %vm50, %v34, %v37
    %v55 = vsel %vm53, %v43, 2102212464
    %v56 = vsel %vm52, %v40, %v55
    %v57 = vsel %vm51, %v54, %v56
    %v58 = vsel %vm50, %v37, %v40
    %v59 = vsel %vm53, %v46, 920167782
    %v60 = vsel %vm52, %v43, %v59
    %v61 = vsel %vm51, %v58, %v60
    %v62 = vsel %vm50, %v40, %v43
    %v63 = vsel %vm53, %v49, 1326507024
    %v64 = vsel %vm52, %v46, %v63
    %v65 = vsel %vm51, %v62, %v64
    %v66 = vshll.u32 %v26, 8
    %v67 = vmul.u32.u64.compose %v66, %v65
    %v68 = vextract.low.u32 %v67
    %v69 = vextract.high.u32 %v67
    %v70 = vmul.u32.u64.compose %v66, %v61
    %v71 = vextract.low.u32 %v70
    %v72 = vextract.high.u32 %v70
    %v73 = vmul.u32 %v66, %v57
    %v74 = vadd.s32 %v69, %v71
    %vm75 = vc.u32 %v69, %v71
    %v76 = vadd.s32 %v72, 1
    %v77 = vsel %vm75, %v76, %v72
    %v78 = vadd.s32 %v73, %v77
    %v79 = vadd.s32 %v78, 536870912
    %v80 = vshrl.u32 %v79, 30
    %v81 = vshll.u32 %v80, 30
    %v82 = vsub.s32 %v78, %v81
    %vm83 = vcmp.lt.s32.totalorder %v82, 0
    %v84 = vsub.s32 0, %v82
    %v85 = vsel %vm83, %v84, %v82
    %v86 = vclz %v85
    %v87 = vsub.s32 %v86, 2
    %vm88 = vcmp.gt.s32.totalorder 0, %v87
    %v89 = vsel %vm88, 0, %v87
    %v90 = vsub.s32 32, %v89
    %v91 = vshll.u32 %v82, %v89
    %v92 = vshrl.u32 %v74, %v90
    %v93 = vor.u32 %v91, %v92
    %v94 = vsub.s32 4294967266, %v89
    %v95 = vadd.s32 %v94, 127
    %v96 = vshll.u32 %v95, 23
    %v97 = vor.u32 4788187, %v96
    %v98 = vand.u32 2147483647, %v97
    %v100 = vcvt.s32.f32 %v93
    %v101 = vmul.f32 %v100, %v98
    %v102 = vxor.u32 %v101, 2147483648
    %v103 = vsel %vm20, %v102, %v101
    %v104 = vsub.s32 4, %v80
    %v105 = vsel %vm20, %v104, %v80
    %v106 = vsel %vm19, %v17, %v103
    %v107 = vsel %vm19, 0, %v105
    %v108 = vcosq.f32.pop %v106
    %v109 = vsinq.f32.pop %v106
    %vm110 = vweird.f32 %v17
    %v111 = vadd.s32 %v107, 3
    %v112 = vand.u32 %v111, 3
    %vm113 = vcmp.lt.s32.totalorder %v112, 2
    %vm114 = vcmp.eq.s32.totalorder %v112, 0
    %v115 = vxor.u32 %v109, 2147483648
    %v116 = vsel %vm114, %v108, %v115
    %vm117 = vcmp.eq.s32.totalorder %v112, 2
    %v118 = vxor.u32 %v108, 2147483648
    %v119 = vsel %vm117, %v118, %v109
    %v120 = vsel %vm113, %v116, %v119
    %v121 = vsel %vm110, nan, %v120
    %v122 = vmul.f32 %v121, %v121
    %v123 = vsub.f32 1.0, %v122
    %v124 = vrsqrt.pop %v123
    %v125 = vmul.f32 %v123, %v124
    %vm126 = vcmp.eq.f32.partialorder %v123, inf
    %v127 = vsel %vm126, %v123, %v125
    %vm128 = vcmp.eq.f32.partialorder %v123, 0.0
    %v129 = vand.u32 %v123, 2147483648
    %v130 = vsel %vm128, %v129, %v127
    %v131 = vlaneseq
    %v132 = vshrl.u32 %v131, 7
    %v133 = vadd.s32 %v132, 8
    %v134 = vshra.s32 %v132, 3
    %v135 = vshra.s32 %v133, 3
    %v136 = vand.u32 %v134, 1
    %v137 = vand.u32 %v135, 1
    %vm138 = vcmp.eq.s32.totalorder %v136, 1
    %vm139 = vcmp.eq.s32.totalorder %v137, 1
    %v140 = vsel %vm138, 1, 0
    %v141 = vsel %vm139, 1, 0
    %vm142 = vcmp.eq.s32.totalorder %v140, 1
    %vm143 = vcmp.eq.s32.totalorder %v141, 1
    %v144 = vlaneseq
    %v145 = vshrl.u32 %v144, 7
    %v146 = vsub.s32 0, %v145
    %v147 = vrot.slane %v121, %v146
    %v148 = vlaneseq
    %v149 = vshrl.u32 %v148, 7
    %v150 = vsub.s32 0, %v149
    %v151 = vrot.slane %v130, %v150
    %v152 = vsel %vm142, %v147, %v151
    %v153 = vsel %vm143, %v147, %v151
    %v154 = vshra.s32 %v132, 2
    %v155 = vshra.s32 %v133, 2
    %v156 = vand.u32 %v154, 1
    %v157 = vand.u32 %v155, 1
    %vm158 = vcmp.eq.s32.totalorder %v156, 1
    %vm159 = vcmp.eq.s32.totalorder %v157, 1
    %v160 = vsel %vm158, 1, 0
    %v161 = vsel %vm159, 1, 0
    %vm162 = vcmp.eq.s32.totalorder %v160, 1
    %vm163 = vcmp.eq.s32.totalorder %v161, 1
    %v164 = vlaneseq
    %v165 = vshrl.u32 %v164, 7
    %v166 = vsub.s32 1, %v165
    %v167 = vrot.slane %v121, %v166
    %v168 = vlaneseq
    %v169 = vshrl.u32 %v168, 7
    %v170 = vsub.s32 1, %v169
    %v171 = vrot.slane %v130, %v170
    %v172 = vsel %vm162, %v167, %v171
    %v173 = vsel %vm163, %v167, %v171
    %v174 = vmul.f32 %v152, %v172
    %v175 = vmul.f32 %v153, %v173
    %v176 = vshra.s32 %v132, 1
    %v177 = vshra.s32 %v133, 1
    %v178 = vand.u32 %v176, 1
    %v179 = vand.u32 %v177, 1
    %vm180 = vcmp.eq.s32.totalorder %v178, 1
    %vm181 = vcmp.eq.s32.totalorder %v179, 1
    %v182 = vsel %vm180, 1, 0
    %v183 = vsel %vm181, 1, 0
    %vm184 = vcmp.eq.s32.totalorder %v182, 1
    %vm185 = vcmp.eq.s32.totalorder %v183, 1
    %v186 = vlaneseq
    %v187 = vshrl.u32 %v186, 7
    %v188 = vsub.s32 2, %v187
    %v189 = vrot.slane %v121, %v188
    %v190 = vlaneseq
    %v191 = vshrl.u32 %v190, 7
    %v192 = vsub.s32 2, %v191
    %v193 = vrot.slane %v130, %v192
    %v194 = vsel %vm184, %v189, %v193
    %v195 = vsel %vm185, %v189, %v193
    %v196 = vmul.f32 %v174, %v194
    %v197 = vmul.f32 %v175, %v195
    %v198 = vand.u32 %v132, 1
    %v199 = vand.u32 %v133, 1
    %vm200 = vcmp.eq.s32.totalorder %v198, 1
    %vm201 = vcmp.eq.s32.totalorder %v199, 1
    %v202 = vsel %vm200, 1, 0
    %v203 = vsel %vm201, 1, 0
    %vm204 = vcmp.eq.s32.totalorder %v202, 1
    %vm205 = vcmp.eq.s32.totalorder %v203, 1
    %v206 = vlaneseq
    %v207 = vshrl.u32 %v206, 7
    %v208 = vsub.s32 3, %v207
    %v209 = vrot.slane %v121, %v208
    %v210 = vlaneseq
    %v211 = vshrl.u32 %v210, 7
    %v212 = vsub.s32 3, %v211
    %v213 = vrot.slane %v130, %v212
    %v214 = vsel %vm204, %v209, %v213
    %v215 = vsel %vm205, %v209, %v213
    %v216 = vmul.f32 %v196, %v214
    %v217 = vmul.f32 %v197, %v215
    %v218 = vld [vmem:[%s1] sm:$0xff]
    %v219 = vld [vmem:[%s1 + $0x8] sm:$0xff]
    %v220 = vld [vmem:[%s1 + $0x10] sm:$0xff]
    %v221 = vld [vmem:[%s1 + $0x18] sm:$0xff]
    %vm222 = vcmask 130048
    %v224 = vsel %vm222, %v218, 0
    %v227 = vsel %vm222, %v219, 0
    %v230 = vsel %vm222, %v220, 0
    %v233 = vsel %vm222, %v221, 0
    %235 = vmatprep.subr.mxu0 0.0
    %236 = vmatpush1.msra.mxu0 %v216
    %237 = vmatprep.subr.mxu0 0.0
    %238 = vmatpush1.msra.mxu0 %v217
    %239 = vmatprep.subr.mxu0 0.0
    %240 = vmatpush1.msra.mxu0 0.0
    %241 = vmatprep.subr.mxu0 0.0
    %242 = vmatpush1.msra.mxu0 0.0
    %243 = vmatprep.subr.mxu0 0.0
    %244 = vmatpush1.msra.mxu0 0.0
    %245 = vmatprep.subr.mxu0 0.0
    %246 = vmatpush1.msra.mxu0 0.0
    %247 = vmatprep.subr.mxu0 0.0
    %248 = vmatpush1.msra.mxu0 0.0
    %249 = vmatprep.subr.mxu0 0.0
    %250 = vmatpush1.msra.mxu0 0.0
    %251 = vmatprep.subr.mxu0 0.0
    %252 = vmatpush1.msra.mxu0 0.0
    %253 = vmatprep.subr.mxu0 0.0
    %254 = vmatpush1.msra.mxu0 0.0
    %255 = vmatprep.subr.mxu0 0.0
    %256 = vmatpush1.msra.mxu0 0.0
    %257 = vmatprep.subr.mxu0 0.0
    %258 = vmatpush1.msra.mxu0 0.0
    %259 = vmatprep.subr.mxu0 0.0
    %260 = vmatpush1.msra.mxu0 0.0
    %261 = vmatprep.subr.mxu0 0.0
    %262 = vmatpush1.msra.mxu0 0.0
    %263 = vmatprep.subr.mxu0 0.0
    %264 = vmatpush1.msra.mxu0 0.0
    %265 = vmatprep.subr.mxu0 0.0
    %266 = vmatpush1.msra.mxu0 0.0
    %267 = vmatprep.subr.mxu0 0.0
    %268 = vmatpush1.msra.mxu0 0.0
    %269 = vmatprep.subr.mxu0 0.0
    %270 = vmatpush1.msra.mxu0 0.0
    %271 = vmatprep.subr.mxu0 0.0
    %272 = vmatpush1.msra.mxu0 0.0
    %273 = vmatprep.subr.mxu0 0.0
    %274 = vmatpush1.msra.mxu0 0.0
    %275 = vmatprep.subr.mxu0 0.0
    %276 = vmatpush1.msra.mxu0 0.0
    %277 = vmatprep.subr.mxu0 0.0
    %278 = vmatpush1.msra.mxu0 0.0
    %279 = vmatprep.subr.mxu0 0.0
    %280 = vmatpush1.msra.mxu0 0.0
    %281 = vmatprep.subr.mxu0 0.0
    %282 = vmatpush1.msra.mxu0 0.0
    %283 = vmatprep.subr.mxu0 0.0
    %284 = vmatpush1.msra.mxu0 0.0
    %285 = vmatprep.subr.mxu0 0.0
    %286 = vmatpush1.msra.mxu0 0.0
    %287 = vmatprep.subr.mxu0 0.0
    %288 = vmatpush1.msra.mxu0 0.0
    %289 = vmatprep.subr.mxu0 0.0
    %290 = vmatpush1.msra.mxu0 0.0
    %291 = vmatprep.subr.mxu0 0.0
    %292 = vmatpush1.msra.mxu0 0.0
    %293 = vmatprep.subr.mxu0 0.0
    %294 = vmatpush1.msra.mxu0 0.0
    %295 = vmatprep.subr.mxu0 0.0
    %296 = vmatpush1.msra.mxu0 0.0
    %297 = vmatprep.subr.mxu0 0.0
    %298 = vmatpush1.msra.mxu0 0.0
    %299 = vmatprep.mubr.f32.mxu0 0.0
    %300 = vmatmul.mubr.f32.gmra.mrb[0].mxu0 %v224
    %v301 = vpop.f32.mrb[0].mxu0
    %v302 = vadd.f32 0.0, %v301
    %v303 = vpop.f32.mrb[0].mxu0
    %304 = vmatprep.mubr.f32.mxu0 0.0
    %305 = vmatmul.mubr.f32.gmra.mrb[0].mxu0 %v227
    %v306 = vpop.f32.mrb[0].mxu0
    %v307 = vadd.f32 0.0, %v306
    %v308 = vpop.f32.mrb[0].mxu0
    %309 = vmatprep.mubr.f32.mxu0 0.0
    %310 = vmatmul.mubr.f32.gmra.mrb[0].mxu0 %v230
    %v311 = vpop.f32.mrb[0].mxu0
    %v312 = vadd.f32 0.0, %v311
    %v313 = vpop.f32.mrb[0].mxu0
    %314 = vmatprep.mubr.f32.mxu0 0.0
    %315 = vmatmul.mubr.f32.gmra.mrb[0].mxu0 %v233
    %v316 = vpop.f32.mrb[0].mxu0
    %v317 = vadd.f32 0.0, %v316
    %v318 = vpop.f32.mrb[0].mxu0
    %319 = vdwg.mxu0
    %v320 = vmul.f32 %v302, %v302
    %v321 = vmul.f32 %v307, %v307
    %v322 = vmul.f32 %v312, %v312
    %v323 = vmul.f32 %v317, %v317
    %v324 = vld [vmem:[%s2] sm:$0xf]
    %vm325 = vcmask 261120
    %v327 = vsel %vm325, %v324, 0
    %329 = vmatprep.subr.mxu0 0.0
    %330 = vmatpush1.msra.mxu0 %v320
    %331 = vmatprep.subr.mxu0 0.0
    %332 = vmatpush1.msra.mxu0 %v321
    %333 = vmatprep.subr.mxu0 0.0
    %334 = vmatpush1.msra.mxu0 %v322
    %335 = vmatprep.subr.mxu0 0.0
    %336 = vmatpush1.msra.mxu0 %v323
    %337 = vmatprep.subr.mxu0 0.0
    %338 = vmatpush1.msra.mxu0 0.0
    %339 = vmatprep.subr.mxu0 0.0
    %340 = vmatpush1.msra.mxu0 0.0
    %341 = vmatprep.subr.mxu0 0.0
    %342 = vmatpush1.msra.mxu0 0.0
    %343 = vmatprep.subr.mxu0 0.0
    %344 = vmatpush1.msra.mxu0 0.0
    %345 = vmatprep.subr.mxu0 0.0
    %346 = vmatpush1.msra.mxu0 0.0
    %347 = vmatprep.subr.mxu0 0.0
    %348 = vmatpush1.msra.mxu0 0.0
    %349 = vmatprep.subr.mxu0 0.0
    %350 = vmatpush1.msra.mxu0 0.0
    %351 = vmatprep.subr.mxu0 0.0
    %352 = vmatpush1.msra.mxu0 0.0
    %353 = vmatprep.subr.mxu0 0.0
    %354 = vmatpush1.msra.mxu0 0.0
    %355 = vmatprep.subr.mxu0 0.0
    %356 = vmatpush1.msra.mxu0 0.0
    %357 = vmatprep.subr.mxu0 0.0
    %358 = vmatpush1.msra.mxu0 0.0
    %359 = vmatprep.subr.mxu0 0.0
    %360 = vmatpush1.msra.mxu0 0.0
    %361 = vmatprep.subr.mxu0 0.0
    %362 = vmatpush1.msra.mxu0 0.0
    %363 = vmatprep.subr.mxu0 0.0
    %364 = vmatpush1.msra.mxu0 0.0
    %365 = vmatprep.subr.mxu0 0.0
    %366 = vmatpush1.msra.mxu0 0.0
    %367 = vmatprep.subr.mxu0 0.0
    %368 = vmatpush1.msra.mxu0 0.0
    %369 = vmatprep.subr.mxu0 0.0
    %370 = vmatpush1.msra.mxu0 0.0
    %371 = vmatprep.subr.mxu0 0.0
    %372 = vmatpush1.msra.mxu0 0.0
    %373 = vmatprep.subr.mxu0 0.0
    %374 = vmatpush1.msra.mxu0 0.0
    %375 = vmatprep.subr.mxu0 0.0
    %376 = vmatpush1.msra.mxu0 0.0
    %377 = vmatprep.subr.mxu0 0.0
    %378 = vmatpush1.msra.mxu0 0.0
    %379 = vmatprep.subr.mxu0 0.0
    %380 = vmatpush1.msra.mxu0 0.0
    %381 = vmatprep.subr.mxu0 0.0
    %382 = vmatpush1.msra.mxu0 0.0
    %383 = vmatprep.subr.mxu0 0.0
    %384 = vmatpush1.msra.mxu0 0.0
    %385 = vmatprep.subr.mxu0 0.0
    %386 = vmatpush1.msra.mxu0 0.0
    %387 = vmatprep.subr.mxu0 0.0
    %388 = vmatpush1.msra.mxu0 0.0
    %389 = vmatprep.subr.mxu0 0.0
    %390 = vmatpush1.msra.mxu0 0.0
    %391 = vmatprep.subr.mxu0 0.0
    %392 = vmatpush1.msra.mxu0 0.0
    %393 = vmatprep.mubr.f32.mxu0 0.0
    %394 = vmatmul.mubr.f32.gmra.mrb[0].mxu0 %v327
    %v395 = vpop.f32.mrb[0].mxu0
    %v396 = vadd.f32 0.0, %v395
    %v397 = vpop.f32.mrb[0].mxu0
    %398 = vdwg.mxu0
    %399 = vst [vmem:[#allocation2] sm:$0xf] %v396
    // Predicated region
    $region14: #{tpu_custom_call.1} parent=1 // pred_check
      _
    $region15: #{tpu_custom_call.1} parent=1 // pred_check_branch
      %401 = sbr.rel (0) target = $region17
    $region16: #{tpu_custom_call.1} parent=1 // pred_region
      %s403 = ssub.s32 64, 64
      %404 = vsyncadd [#allocation3], %s403
      %s406 = sshll.u32 [#allocation2], 4
      %s407 = int_to_ptr.vmem [resolvable:$true] %s406
      %409 = dma.vmem_to_hbm [thread:$0]  %s407, 64, %s3, [#allocation3]
    $region17: #{tpu_custom_call.1} parent=1 // pred_fallthru
      _
    // Predicated region
    $region18: #{tpu_custom_call.1} parent=1 // pred_check
      _
    $region19: #{tpu_custom_call.1} parent=1 // pred_check_branch
      %411 = sbr.rel (0) target = $region21
    $region20: #{tpu_custom_call.1} parent=1 // pred_region
      %412 = dma.done [#allocation3], 64
    $region21: #{tpu_custom_call.1} parent=1 // pred_fallthru
      _
    %413 = vsyncpa [#allocation3], 1

</llo_original>
